<compile_context>
chip_gen: v5e
topology: v5e:2x2
jax: 0.10.0
libtpu: 0.0.40
codegen_flags: <defaults>
</compile_context>

<pallas_src>
import numpy as np

import jax
import jax.numpy as jnp
from jax.experimental import pallas as pl
from jax.experimental.pallas import tpu as pltpu

_LANE = 128
_SUBLANE = 8
_TARGET_STEP_BYTES = 2 << 20    # ~2 MiB of HBM traffic per grid step
_VMEM_TILE_BUDGET = 16 << 20    # double-buffered in+out tiles stay under this
_VMEM_LIMIT = 32 << 20          # safe on v5e / v6e / v7x (v7x: 64 MiB physical)
_FOLD_LIMIT_BYTES = 4 << 20     # max size of the folded (Kronecker) weight


def _round_up(v, m):
    return -(-v // m) * m


def _ols_forecast_matrix(L, H):
    """(H, L) float64 matrix W with pred = W @ y per feature column."""
    t = np.arange(L, dtype=np.float64)
    t_mean = (L - 1) / 2.0
    var_t = L * (L * L - 1) / 12.0          # sum((t - t_mean)^2)
    h = np.arange(L, L + H, dtype=np.float64)
    return 1.0 / L + np.outer(h - t_mean, t - t_mean) / var_t


# ---------------------------------------------------------------------------
# Kernels: one resident-weight MXU matmul per tile, no in-kernel casts.
# ---------------------------------------------------------------------------

def _fold_kernel(m_ref, x_ref, o_ref):
    # m_ref: (L*D_in, H*D_out) folded weights (resident)
    # x_ref: (TB, L*D_in) batch-row tile;  o_ref: (TB, H*D_out)
    o_ref[...] = jnp.dot(x_ref[...], m_ref[...],
                         preferred_element_type=jnp.float32)


def _cols_kernel(w_ref, x_ref, o_ref):
    # w_ref: (H, L) weights (resident); x_ref: (L, TN); o_ref: (H, TN)
    o_ref[...] = jnp.dot(w_ref[...], x_ref[...],
                         preferred_element_type=jnp.float32)


# ---------------------------------------------------------------------------
# Primary path: folded weights, grid over batch rows, zero layout passes.
# ---------------------------------------------------------------------------

def _forward_folded(x, D_in, D_out, L, H, w_dtype):
    B = x.shape[0]
    itemsize = jnp.dtype(x.dtype).itemsize
    K = L * D_in
    Nout = H * D_out

    W = _ols_forecast_matrix(L, H)                          # (H, L) f64
    sel = np.zeros((D_in, D_out), dtype=np.float64)
    sel[np.arange(D_out) % D_in, np.arange(D_out)] = 1.0    # modulo feature map
    M = np.einsum('ht,io->tiho', W, sel).reshape(K, Nout)
    M = jnp.asarray(M, dtype=w_dtype)

    # Batch-row tile sized from HBM volume (~2 MiB/step), capped by VMEM.
    row_bytes = K * itemsize + Nout * 4
    tb = max(1, _TARGET_STEP_BYTES // row_bytes)
    tb = min(tb, max(1, (_VMEM_TILE_BUDGET // 2) // row_bytes))
    tb = max(_SUBLANE, (tb // _SUBLANE) * _SUBLANE)
    num_tiles = max(1, -(-B // tb))
    if B >= 2 * _SUBLANE and num_tiles == 1:
        num_tiles = 2                       # give both v7x TensorCores work
    if num_tiles == 1:
        tb, b_pad = B, B                    # block == full dim: no 8-multiple rule
    else:
        tb = _round_up(-(-B // num_tiles), _SUBLANE)
        b_pad = num_tiles * tb

    x_flat = x.reshape(B, K)                # free: merges trailing dims
    if b_pad != B:
        x_flat = jnp.pad(x_flat, ((0, b_pad - B), (0, 0)))

    flops = 2 * b_pad * K * Nout
    bytes_accessed = (b_pad * K * itemsize + b_pad * Nout * 4
                      + K * Nout * jnp.dtype(w_dtype).itemsize)

    pred = pl.pallas_call(
        _fold_kernel,
        out_shape=jax.ShapeDtypeStruct((b_pad, Nout), jnp.float32),
        grid_spec=pltpu.PrefetchScalarGridSpec(
            num_scalar_prefetch=0,
            grid=(num_tiles,),
            in_specs=[
                pl.BlockSpec((K, Nout), lambda i: (0, 0)),   # folded W, resident
                pl.BlockSpec((tb, K), lambda i: (i, 0)),     # batch-row tile
            ],
            out_specs=pl.BlockSpec((tb, Nout), lambda i: (i, 0)),
        ),
        compiler_params=pltpu.CompilerParams(
            dimension_semantics=("parallel",),
            vmem_limit_bytes=_VMEM_LIMIT,
        ),
        cost_estimate=pl.CostEstimate(flops=int(flops), transcendentals=0,
                                      bytes_accessed=int(bytes_accessed)),
    )(M, x_flat)

    return pred[:B].reshape(B, H, D_out)    # free reshape, output stays f32


# ---------------------------------------------------------------------------
# Fallback path: lane-dense column slab for very large feature counts.
# ---------------------------------------------------------------------------

def _forward_columns(x, D_in, D_out, L, H, w_dtype):
    B = x.shape[0]
    itemsize = jnp.dtype(x.dtype).itemsize
    W = jnp.asarray(_ols_forecast_matrix(L, H), dtype=w_dtype)   # (H, L)

    N = B * D_in
    # TODO(synk): this transpose is an extra HBM pass; only used when the
    # folded weight matrix would not fit in VMEM.
    x_cols = jnp.transpose(x, (1, 0, 2)).reshape(L, N)

    # Column tile from data volume (~2 MiB/step), capped by VMEM, >=2 tiles
    # when the slab is wide enough (v7x megacore), padding waste kept small.
    col_bytes = L * itemsize + H * 4
    tn = max(_LANE, _TARGET_STEP_BYTES // col_bytes)
    tn = min(tn, max(_LANE, (_VMEM_TILE_BUDGET // 2) // col_bytes))
    tn = max(_LANE, (tn // _LANE) * _LANE)
    num_tiles = max(1, -(-N // tn))
    if N >= 2 * _LANE and num_tiles == 1:
        num_tiles = 2
    tn = _round_up(-(-N // num_tiles), _LANE)
    n_pad = num_tiles * tn
    if n_pad != N:
        x_cols = jnp.pad(x_cols, ((0, 0), (0, n_pad - N)))

    flops = 2 * H * L * n_pad
    bytes_accessed = L * n_pad * itemsize + H * n_pad * 4 \
        + H * L * jnp.dtype(w_dtype).itemsize

    pred_cols = pl.pallas_call(
        _cols_kernel,
        out_shape=jax.ShapeDtypeStruct((H, n_pad), jnp.float32),
        grid_spec=pltpu.PrefetchScalarGridSpec(
            num_scalar_prefetch=0,
            grid=(num_tiles,),
            in_specs=[
                pl.BlockSpec((H, L), lambda j: (0, 0)),    # W, resident
                pl.BlockSpec((L, tn), lambda j: (0, j)),   # column tile
            ],
            out_specs=pl.BlockSpec((H, tn), lambda j: (0, j)),
        ),
        compiler_params=pltpu.CompilerParams(
            dimension_semantics=("parallel",),
            vmem_limit_bytes=_VMEM_LIMIT,
        ),
        cost_estimate=pl.CostEstimate(flops=int(flops), transcendentals=0,
                                      bytes_accessed=int(bytes_accessed)),
    )(W, x_cols)

    pred = pred_cols[:, :N].reshape(H, B, D_in).transpose(1, 0, 2)  # (B, H, D_in)
    # Modulo feature mapping via static slices / concat (fusible by XLA).
    if D_out <= D_in:
        return pred[..., :D_out]
    reps, rem = divmod(D_out, D_in)
    parts = [pred] * reps
    if rem:
        parts.append(pred[..., :rem])
    return jnp.concatenate(parts, axis=-1)


# ---------------------------------------------------------------------------
# Public entry point.
# ---------------------------------------------------------------------------

def statistical_linear_regression(x, *, input_dim, output_dim, input_length,
                                  output_length,
                                  fold_limit_bytes=_FOLD_LIMIT_BYTES):
    """x: (B, input_length, input_dim) -> (B, output_length, output_dim) f32."""
    B, L, D_in = x.shape
    assert L == input_length and D_in == input_dim
    H, D_out = output_length, output_dim

    if x.dtype not in (jnp.float32, jnp.bfloat16):
        x = x.astype(jnp.float32)
    # Weights match the activation dtype so the MXU sees a single-dtype matmul;
    # accumulation is always f32 via preferred_element_type. (Keeping f32
    # weights for f32 activations preserves the float64-built fit precision.)
    w_dtype = jnp.bfloat16 if x.dtype == jnp.bfloat16 else jnp.float32

    folded_bytes = L * D_in * H * D_out * jnp.dtype(w_dtype).itemsize
    min_fold_tile_bytes = 2 * _SUBLANE * (
        L * D_in * jnp.dtype(x.dtype).itemsize + H * D_out * 4)
    if folded_bytes <= fold_limit_bytes and min_fold_tile_bytes <= _VMEM_TILE_BUDGET:
        return _forward_folded(x, D_in, D_out, L, H, w_dtype)
    return _forward_columns(x, D_in, D_out, L, H, w_dtype)


def _reference_jax(x, *, input_dim, output_dim, input_length, output_length):
    """Pure-JAX closed-form OLS forecast (sanity check)."""
    x = x.astype(jnp.float32)
    t = jnp.arange(input_length, dtype=jnp.float32)[:, None]
    t_mean = (input_length - 1) / 2.0
    t_c = t - t_mean
    y_mean = jnp.mean(x, axis=1, keepdims=True)                        # (B,1,D)
    slope = jnp.sum(t_c[None] * (x - y_mean), axis=1, keepdims=True) \
        / jnp.sum(t_c * t_c)                                            # (B,1,D)
    ft = jnp.arange(input_length, input_length + output_length,
                    dtype=jnp.float32)[None, :, None]                   # (1,H,1)
    pred = y_mean + slope * (ft - t_mean)                               # (B,H,D)
    in_idx = jnp.arange(output_dim) % input_dim
    return jnp.take(pred, in_idx, axis=2)


if __name__ == "__main__":
    # Small shapes consistent with the module's constructor.
    B = 2
    input_dim = 4
    output_dim = 6          # exercises the modulo feature mapping
    input_length = 16
    output_length = 8

    key = jax.random.PRNGKey(0)
    x = jax.random.normal(key, (B, input_length, input_dim), dtype=jnp.float32)

    kwargs = dict(input_dim=input_dim, output_dim=output_dim,
                  input_length=input_length, output_length=output_length)

    out = jax.block_until_ready(statistical_linear_regression(x, **kwargs))
    ref = _reference_jax(x, **kwargs)

    assert out.shape == (B, output_length, output_dim)
    assert out.dtype == jnp.float32
    assert jnp.allclose(out, ref, atol=1e-4, rtol=1e-4)

    # Also exercise (and verify) the large-problem column-slab path.
    out_cols = jax.block_until_ready(
        statistical_linear_regression(x, fold_limit_bytes=0, **kwargs))
    assert out_cols.shape == (B, output_length, output_dim)
    assert jnp.allclose(out_cols, ref, atol=1e-4, rtol=1e-4)

    print("KERNEL_OK")
</pallas_src>

<mosaic_0001>
module attributes {stable_mosaic.version = 11 : i64} {
  func.func @_fold_kernel(%arg0: i32, %arg1: memref<64x48xf32, #tpu.memory_space<vmem>>, %arg2: memref<2x64xf32, #tpu.memory_space<vmem>>, %arg3: memref<2x48xf32, #tpu.memory_space<vmem>>) attributes {dimension_semantics = [#tpu.dimension_semantics<parallel>], iteration_bounds = array<i64: 1>, scalar_prefetch = 0 : i64, scratch_operands = 0 : i64, tpu.core_type = #tpu.core_type<tc>, window_params = [{pipeline_mode = #tpu.pipeline_mode<synchronous>, transform_indices = @transform_0, window_bounds = array<i64: 64, 48>}, {transform_indices = @transform_1, window_bounds = array<i64: 2, 64>}, {transform_indices = @transform_2, window_bounds = array<i64: 2, 48>}]} {
    %c0 = arith.constant 0 : index
    %c0_0 = arith.constant 0 : index
    %0 = vector.load %arg2[%c0, %c0_0] : memref<2x64xf32, #tpu.memory_space<vmem>>, vector<2x64xf32>
    %c0_1 = arith.constant 0 : index
    %c0_2 = arith.constant 0 : index
    %1 = vector.load %arg1[%c0_1, %c0_2] : memref<64x48xf32, #tpu.memory_space<vmem>>, vector<64x48xf32>
    %cst = arith.constant dense<0.000000e+00> : vector<2x48xf32>
    %2 = tpu.matmul %0, %1, %cst {dimension_numbers = #tpu.dot_dimension_numbers<[1], [0], [0], [1], [0, 0, 1, 1], [], []>} : vector<2x64xf32>, vector<64x48xf32>, vector<2x48xf32> -> vector<2x48xf32>
    %c0_3 = arith.constant 0 : index
    %c0_4 = arith.constant 0 : index
    %3 = vector.load %arg3[%c0_3, %c0_4] : memref<2x48xf32, #tpu.memory_space<vmem>>, vector<2x48xf32>
    tpu.vector_store %arg3[%c0_3, %c0_4], %2 {strides = array<i32>} : memref<2x48xf32, #tpu.memory_space<vmem>>, vector<2x48xf32>,
    return
  }
  func.func @transform_0(%arg0: i32) -> (i32, i32) {
    %c0_i32 = arith.constant 0 : i32
    %c0_i32_0 = arith.constant 0 : i32
    %c0_i32_1 = arith.constant 0 : i32
    return %c0_i32, %c0_i32_0 : i32, i32
  }
  func.func @transform_1(%arg0: i32) -> (i32, i32) {
    %c0_i32 = arith.constant 0 : i32
    %c0_i32_0 = arith.constant 0 : i32
    return %arg0, %c0_i32 : i32, i32
  }
  func.func @transform_2(%arg0: i32) -> (i32, i32) {
    %c0_i32 = arith.constant 0 : i32
    %c0_i32_0 = arith.constant 0 : i32
    return %arg0, %c0_i32 : i32, i32
  }
}

</mosaic_0001>

<llo_original>
// kernel: tpu_custom_call.1
$region0: #{tpu_custom_call.1}
  #allocation0 [shape = 'u32[]', space=smem, size = 0x4, offset = 0x4, fixed_abs, tag = 'smem constant byte address 0x4 - core index']
  #allocation1 [shape = 'u32[72,128]{1,0:T(1,128)}', space=vmem, size = 0x9000, scoped, tag = 'internal scratch']
  %s0 = inlined_call_operand.vmem [shape: f32[64,48], index: 0, kind: input, shape index: {}]
  %s1 = inlined_call_operand.vmem [shape: f32[2,64], index: 1, kind: input, shape index: {}]
  %s2 = inlined_call_operand.hbm [shape: f32[2,48], index: 2, kind: output, shape index: {}]
  %s3 = sld [smem:[#allocation0]]
  $region18: #{tpu_custom_call.1} parent=0
    _
  %s5 = ssub.s32 1, %s3
  %s6 = scalar_select 0, %s5, %s3
  $region1: #{tpu_custom_call.1} parent=0
    #allocation2 [shape = 'u8[1024]{0}', space=vmem, size = 0x400, scoped, tag = 'output window, operand 0, single buffered']
    #allocation3 [shape = 's32[1]{0}', space=sflag, size = 0x4, scoped, tag = 'scoped memory for tpu_custom_call.1']
    %7 = vsyncpa [#allocation3], 0
    // Predicated region
    $region2: #{tpu_custom_call.1} parent=1 // pred_check
      _
    $region3: #{tpu_custom_call.1} parent=1 // pred_check_branch
      %9 = sbr.rel (0) target = $region5
    $region4: #{tpu_custom_call.1} parent=1 // pred_region
      _
    $region5: #{tpu_custom_call.1} parent=1 // pred_fallthru
      _
    // Predicated region
    $region6: #{tpu_custom_call.1} parent=1 // pred_check
      _
    $region7: #{tpu_custom_call.1} parent=1 // pred_check_branch
      %11 = sbr.rel (0) target = $region9
    $region8: #{tpu_custom_call.1} parent=1 // pred_region
      _
    $region9: #{tpu_custom_call.1} parent=1 // pred_fallthru
      _
    %v12 = vld [vmem:[%s1] sm:$0x3]
    %v13 = vld [vmem:[%s0] sm:$0xff]
    %v14 = vld [vmem:[%s0 + $0x8] sm:$0xff]
    %v15 = vld [vmem:[%s0 + $0x10] sm:$0xff]
    %v16 = vld [vmem:[%s0 + $0x18] sm:$0xff]
    %v17 = vld [vmem:[%s0 + $0x20] sm:$0xff]
    %v18 = vld [vmem:[%s0 + $0x28] sm:$0xff]
    %v19 = vld [vmem:[%s0 + $0x30] sm:$0xff]
    %v20 = vld [vmem:[%s0 + $0x38] sm:$0xff]
    %vm21 = vcmask 523264
    %v23 = vsel %vm21, %v12, 0
    %25 = vmatpush.msra.mxu0 0.0
    %26 = vmatpush.msra.mxu0 0.0
    %27 = vmatpush.msra.mxu0 0.0
    %28 = vmatpush.msra.mxu0 0.0
    %29 = vmatpush.msra.mxu0 0.0
    %30 = vmatpush.msra.mxu0 0.0
    %31 = vmatpush.msra.mxu0 0.0
    %32 = vmatpush.msra.mxu0 0.0
    %33 = vmatpush.msra.mxu0 %v20
    %34 = vmatpush.msra.mxu0 %v19
    %35 = vmatpush.msra.mxu0 %v18
    %36 = vmatpush.msra.mxu0 %v17
    %37 = vmatpush.msra.mxu0 %v16
    %38 = vmatpush.msra.mxu0 %v15
    %39 = vmatpush.msra.mxu0 %v14
    %40 = vmatpush.msra.mxu0 %v13
    %41 = vmatmul.f32.gmra.mxu0 %v23
    %v42 = vpop.f32.mrf.mxu0
    %v43 = vadd.f32 0.0, %v42
    %44 = vdwg.mxu0
    %vm45 = vcmask 386048
    %46 = vst.msk [vmem:[#allocation2] sm:$0x3] %vm45, %v43
    // Predicated region
    $region10: #{tpu_custom_call.1} parent=1 // pred_check
      _
    $region11: #{tpu_custom_call.1} parent=1 // pred_check_branch
      %48 = sbr.rel (0) target = $region13
    $region12: #{tpu_custom_call.1} parent=1 // pred_region
      %50 = vsyncadd [#allocation3], 0
      %s52 = sshll.u32 [#allocation2], 4
      %s53 = int_to_ptr.vmem [resolvable:$true] %s52
      %s54 = sshll.u32 %s2, 4
      %s55 = int_to_ptr.hbm [resolvable:$true] %s54
      %57 = dma.vmem_to_hbm [thread:$0]  %s53, 32, %s55, [#allocation3]
    $region13: #{tpu_custom_call.1} parent=1 // pred_fallthru
      _
    // Predicated region
    $region14: #{tpu_custom_call.1} parent=1 // pred_check
      _
    $region15: #{tpu_custom_call.1} parent=1 // pred_check_branch
      %59 = sbr.rel (0) target = $region17
    $region16: #{tpu_custom_call.1} parent=1 // pred_region
      %61 = dma.done [#allocation3], 32
    $region17: #{tpu_custom_call.1} parent=1 // pred_fallthru
      _
    %62 = vsyncpa [#allocation3], 1

</llo_original>
